<compile_context>
chip_gen: v7x
topology: tpu7x:2x2x1
jax: 0.10.0
libtpu: 0.0.40
codegen_flags: <defaults>
</compile_context>

<pallas_src>
import jax
import jax.numpy as jnp
import numpy as np
from jax.experimental import pallas as pl
from jax.experimental.pallas import tpu as pltpu

# Synthetic vocab sizes (stand-ins for len(lookup1) / len(venus_dict) / 88 server models).
VOCAB_MSG = 32
VOCAB_VENUS = 16
VOCAB_SERVER = 88

D_F1, D_F2, D_F3 = 12, 6, 8
D_MSG = D_F1 + D_F2 + D_F3            # 26
D_SRV = 8
N_VENUS = 3                           # venus items per step -> 3 * 4 = 12 features
D_VEN = 4 * N_VENUS                   # 12
D_CLS_IN = D_MSG + D_SRV + D_VEN      # 46
D_CLS_OUT = 10
D_OUT = 4

NEG_BIG = 1e12


def mymodel_v2_kernel(msg_ref, bias_ref, venus_ref, vmask_ref, server_ref,
                      k_wt_ref, o_w_ref, w_att_ref, w_srv_ref, w_ven_ref,
                      cls_b_ref, d2_wt_ref, d2_b_ref, out_ref):
    msg = msg_ref[...]                               # [TB, S, 26]  (bf16 or f32)
    tb, s_len, d = msg.shape

    # ---- AttentionPooling1D(26): k_dense -> tanh -> o_dense -> masked softmax over S ----
    # S is a multiple of 8 (wrapper pads), so this reshape is layout-preserving.
    x2 = msg.reshape(tb * s_len, d)
    h = jnp.tanh(jnp.dot(x2, k_wt_ref[...], preferred_element_type=jnp.float32))
    h3 = h.reshape(tb, s_len, d)                     # [TB, S, 26] f32

    # o_dense as multiply + lane reduce (no N=1 MXU matmul); logits lane-dense [TB, S].
    logits = jnp.sum(h3 * o_w_ref[...], axis=-1)     # [TB, S] f32
    logits = logits + bias_ref[...].astype(jnp.float32)   # precomputed (mask-1)*1e12
    logits = logits - jnp.max(logits, axis=-1, keepdims=True)
    e = jnp.exp(logits)
    inv_denom = pl.reciprocal(jnp.sum(e, axis=-1, keepdims=True), approx=True)
    p = e * inv_denom                                # [TB, S] f32

    # weighted sum over the sequence (accumulate in f32)
    att = jnp.sum(p[..., None] * msg.astype(jnp.float32), axis=1)          # [TB, 26]

    # ---- venus: masked sum over its seq axis ----
    venus = venus_ref[...].astype(jnp.float32)       # [TB, S2, 12]
    vmask = vmask_ref[...].astype(jnp.float32)       # [TB, S2]
    venus_sum = jnp.sum(venus * vmask[..., None], axis=1)                  # [TB, 12]

    server = server_ref[...].astype(jnp.float32)     # [TB, 8]

    # ---- classify (concat folded into split matmuls) + relu + dense2 ----
    score = (jnp.dot(att, w_att_ref[...], preferred_element_type=jnp.float32)
             + jnp.dot(server, w_srv_ref[...], preferred_element_type=jnp.float32)
             + jnp.dot(venus_sum, w_ven_ref[...], preferred_element_type=jnp.float32)
             + cls_b_ref[...])                                             # [TB, 10]
    score = jnp.maximum(score, 0.0)
    out_ref[...] = (jnp.dot(score, d2_wt_ref[...], preferred_element_type=jnp.float32)
                    + d2_b_ref[...]).astype(out_ref.dtype)                 # [TB, 4]


def init_params(key):
    ks = jax.random.split(key, 11)

    def nrm(k, shape, scale=0.1):
        return jax.random.normal(k, shape, jnp.float32) * scale

    p = {}
    # Embeddings: padding_idx=0 -> row 0 zeroed, as in nn.Embedding(padding_idx=0).
    p['emb_msg_f1'] = nrm(ks[0], (VOCAB_MSG, D_F1)).at[0].set(0.0)
    p['emb_msg_f2'] = nrm(ks[1], (VOCAB_MSG, D_F2)).at[0].set(0.0)
    p['emb_msg_f3'] = nrm(ks[2], (VOCAB_MSG, D_F3)).at[0].set(0.0)
    p['emb_servermodel'] = nrm(ks[3], (VOCAB_SERVER, D_SRV)).at[0].set(0.0)
    p['emb_venus'] = nrm(ks[4], (VOCAB_VENUS, 4)).at[0].set(0.0)
    # AttentionPooling1D(26)
    p['k_dense_w'] = nrm(ks[5], (D_MSG, D_MSG))        # Linear(26, 26, bias=False).weight
    p['o_dense_w'] = nrm(ks[6], (1, D_MSG))            # Linear(26, 1, bias=False).weight
    # heads
    p['classify_w'] = nrm(ks[7], (D_CLS_OUT, D_CLS_IN))
    p['classify_b'] = nrm(ks[8], (D_CLS_OUT,))
    p['dense2_w'] = nrm(ks[9], (D_OUT, D_CLS_OUT))
    p['dense2_b'] = nrm(ks[10], (D_OUT,))
    return p


def mymodel_v2_forward(params, feat, *, compute_dtype=jnp.bfloat16, tile_b=512):
    """compute_dtype: dtype of the streamed activations/masks + k_dense matmul operands.
    All elementwise math / accumulation stays f32 inside the kernel."""
    msgs, msg_mask, venus_batch, venus_mask, server_model, crashdump = feat
    del crashdump  # unused by MyModel_V2.forward

    # --- glue: embedding lookups + reshapes (plain JAX) ---
    msg_emb = jnp.concatenate([
        jnp.take(params['emb_msg_f1'], msgs[..., 0], axis=0),
        jnp.take(params['emb_msg_f2'], msgs[..., 1], axis=0),
        jnp.take(params['emb_msg_f3'], msgs[..., 2], axis=0)], axis=-1)     # [B, S, 26]
    venus = jnp.take(params['emb_venus'], venus_batch, axis=0)              # [B, S2, 3, 4]
    b, s2, n, d4 = venus.shape
    venus = venus.reshape(b, s2, n * d4)                                    # [B, S2, 12]
    server = jnp.take(params['emb_servermodel'], server_model, axis=0)      # [B, 8]

    B, S = msg_emb.shape[0], msg_emb.shape[1]
    S2 = venus.shape[1]

    # additive mask bias precomputed outside the kernel hot loop
    mask_bias = (msg_mask.astype(jnp.float32) - 1.0) * NEG_BIG              # [B, S]
    vmask = venus_mask.astype(jnp.float32)                                  # [B, S2]

    # pad S to a multiple of 8 so the in-kernel (TB,S,26)->(TB*S,26) reshape is free
    s_pad = (-S) % 8
    if s_pad:
        msg_emb = jnp.pad(msg_emb, ((0, 0), (0, s_pad), (0, 0)))
        mask_bias = jnp.pad(mask_bias, ((0, 0), (0, s_pad)), constant_values=-NEG_BIG)
    S_p = S + s_pad

    # batch tile: as large as comfortably fits double-buffered VMEM on all generations
    tile_b = int(min(tile_b, B))
    b_pad = (-B) % tile_b
    if b_pad:
        pad_batch = lambda a: jnp.pad(a, ((0, b_pad),) + ((0, 0),) * (a.ndim - 1))
        msg_emb = pad_batch(msg_emb)
        mask_bias = pad_batch(mask_bias)
        venus = pad_batch(venus)
        vmask = pad_batch(vmask)
        server = pad_batch(server)
    Bp = B + b_pad

    # --- kernel-ready weights (transpose / split the concat-matmul) ---
    cd = compute_dtype
    k_wt = params['k_dense_w'].T.astype(cd)                # [26, 26]
    o_w = params['o_dense_w'].astype(jnp.float32)          # [1, 26] (row, used for reduce)
    cls_wt = params['classify_w'].T.astype(jnp.float32)    # [46, 10]
    w_att = cls_wt[:D_MSG]                                 # [26, 10]
    w_srv = cls_wt[D_MSG:D_MSG + D_SRV]                    # [8, 10]
    w_ven = cls_wt[D_MSG + D_SRV:]                         # [12, 10]
    cls_b = params['classify_b'][None, :].astype(jnp.float32)   # [1, 10]
    d2_wt = params['dense2_w'].T.astype(jnp.float32)       # [10, 4]
    d2_b = params['dense2_b'][None, :].astype(jnp.float32) # [1, 4]

    batch3 = lambda i: (i, 0, 0)
    batch2 = lambda i: (i, 0)
    resident = lambda i: (0, 0)

    in_specs = [
        pl.BlockSpec((tile_b, S_p, D_MSG), batch3),        # msg_emb
        pl.BlockSpec((tile_b, S_p), batch2),               # additive mask bias
        pl.BlockSpec((tile_b, S2, D_VEN), batch3),         # venus
        pl.BlockSpec((tile_b, S2), batch2),                # venus mask
        pl.BlockSpec((tile_b, D_SRV), batch2),             # server emb
        pl.BlockSpec((D_MSG, D_MSG), resident),            # k_dense W^T
        pl.BlockSpec((1, D_MSG), resident),                # o_dense row
        pl.BlockSpec((D_MSG, D_CLS_OUT), resident),        # classify W^T (att slice)
        pl.BlockSpec((D_SRV, D_CLS_OUT), resident),        # classify W^T (server slice)
        pl.BlockSpec((D_VEN, D_CLS_OUT), resident),        # classify W^T (venus slice)
        pl.BlockSpec((1, D_CLS_OUT), resident),            # classify bias
        pl.BlockSpec((D_CLS_OUT, D_OUT), resident),        # dense2 W^T
        pl.BlockSpec((1, D_OUT), resident),                # dense2 bias
    ]
    out_spec = pl.BlockSpec((tile_b, D_OUT), batch2)

    out = pl.pallas_call(
        mymodel_v2_kernel,
        out_shape=jax.ShapeDtypeStruct((Bp, D_OUT), jnp.float32),
        grid=(Bp // tile_b,),
        in_specs=in_specs,
        out_specs=out_spec,
        compiler_params=pltpu.CompilerParams(
            dimension_semantics=("parallel",),
            vmem_limit_bytes=48 * 1024 * 1024),
    )(msg_emb.astype(cd), mask_bias.astype(cd), venus.astype(cd), vmask.astype(cd),
      server.astype(cd), k_wt, o_w, w_att, w_srv, w_ven, cls_b, d2_wt, d2_b)
    return out[:B]


def reference_forward(params, feat):
    """Pure-JAX f32 reference mirroring the PyTorch forward."""
    msgs, msg_mask, venus_batch, venus_mask, server_model, _ = feat
    msg_emb = jnp.concatenate([
        params['emb_msg_f1'][msgs[..., 0]],
        params['emb_msg_f2'][msgs[..., 1]],
        params['emb_msg_f3'][msgs[..., 2]]], axis=-1)
    mask = msg_mask[..., None]
    x = msg_emb @ params['k_dense_w'].T
    x = jnp.tanh(x) @ params['o_dense_w'].T
    x = x - (1.0 - mask) * NEG_BIG
    x = jax.nn.softmax(x, axis=-2)
    att_emb = jnp.sum(x * msg_emb, axis=-2)
    venus = params['emb_venus'][venus_batch]
    b, s, n, d = venus.shape
    venus = venus.reshape(b, s, -1)
    venus = jnp.sum(venus * venus_mask[..., None], axis=1)
    server = params['emb_servermodel'][server_model]
    feat_cat = jnp.concatenate([att_emb, server, venus], axis=-1)
    score = feat_cat @ params['classify_w'].T + params['classify_b']
    return jax.nn.relu(score) @ params['dense2_w'].T + params['dense2_b']


def make_feat(key, B, S, S2):
    k1, k2, k3, k4, k5, k6 = jax.random.split(key, 6)
    msgs = jax.random.randint(k1, (B, S, 3), 0, VOCAB_MSG, dtype=jnp.int32)
    msg_lens = jax.random.randint(k5, (B, 1), 1, S + 1)
    msg_mask = (jnp.arange(S)[None, :] < msg_lens).astype(jnp.float32)          # [B, S]
    venus_batch = jax.random.randint(k2, (B, S2, N_VENUS), 0, VOCAB_VENUS, dtype=jnp.int32)
    venus_lens = jax.random.randint(k6, (B, 1), 1, S2 + 1)
    venus_mask = (jnp.arange(S2)[None, :] < venus_lens).astype(jnp.float32)     # [B, S2]
    server_model = jax.random.randint(k3, (B,), 0, VOCAB_SERVER, dtype=jnp.int32)
    crashdump = jax.random.normal(k4, (B, 4), jnp.float32)  # present in feat but unused
    return (msgs, msg_mask, venus_batch, venus_mask, server_model, crashdump)


if __name__ == "__main__":
    key = jax.random.PRNGKey(0)
    pkey, fkey1, fkey2 = jax.random.split(key, 3)
    params = init_params(pkey)

    # --- small config (single grid step, S already a multiple of 8) ---
    feat = make_feat(fkey1, B=2, S=8, S2=4)
    ref = reference_forward(params, feat)

    out_bf16 = jax.block_until_ready(
        mymodel_v2_forward(params, feat, compute_dtype=jnp.bfloat16))
    np.testing.assert_allclose(np.asarray(out_bf16), np.asarray(ref), rtol=2e-2, atol=2e-2)

    out_f32 = jax.block_until_ready(
        mymodel_v2_forward(params, feat, compute_dtype=jnp.float32))
    np.testing.assert_allclose(np.asarray(out_f32), np.asarray(ref), rtol=5e-3, atol=5e-3)

    # --- multi-tile config (exercises batch padding, S padding, 3-step grid) ---
    feat2 = make_feat(fkey2, B=300, S=19, S2=5)
    ref2 = reference_forward(params, feat2)
    out2 = jax.block_until_ready(
        mymodel_v2_forward(params, feat2, compute_dtype=jnp.bfloat16, tile_b=128))
    np.testing.assert_allclose(np.asarray(out2), np.asarray(ref2), rtol=3e-2, atol=3e-2)

    print("KERNEL_OK")
</pallas_src>

<mosaic_0001>
module attributes {stable_mosaic.version = 11 : i64} {
  func.func @mymodel_v2_kernel(%arg0: i32, %arg1: memref<2x8x26xbf16, #tpu.memory_space<vmem>>, %arg2: memref<2x8xbf16, #tpu.memory_space<vmem>>, %arg3: memref<2x4x12xbf16, #tpu.memory_space<vmem>>, %arg4: memref<2x4xbf16, #tpu.memory_space<vmem>>, %arg5: memref<2x8xbf16, #tpu.memory_space<vmem>>, %arg6: memref<26x26xbf16, #tpu.memory_space<vmem>>, %arg7: memref<1x26xf32, #tpu.memory_space<vmem>>, %arg8: memref<26x10xf32, #tpu.memory_space<vmem>>, %arg9: memref<8x10xf32, #tpu.memory_space<vmem>>, %arg10: memref<12x10xf32, #tpu.memory_space<vmem>>, %arg11: memref<1x10xf32, #tpu.memory_space<vmem>>, %arg12: memref<10x4xf32, #tpu.memory_space<vmem>>, %arg13: memref<1x4xf32, #tpu.memory_space<vmem>>, %arg14: memref<2x4xf32, #tpu.memory_space<vmem>>) attributes {dimension_semantics = [#tpu.dimension_semantics<parallel>], iteration_bounds = array<i64: 1>, scalar_prefetch = 0 : i64, scratch_operands = 0 : i64, tpu.core_type = #tpu.core_type<tc>, window_params = [{transform_indices = @transform_0, window_bounds = array<i64: 2, 8, 26>}, {transform_indices = @transform_1, window_bounds = array<i64: 2, 8>}, {transform_indices = @transform_2, window_bounds = array<i64: 2, 4, 12>}, {transform_indices = @transform_3, window_bounds = array<i64: 2, 4>}, {transform_indices = @transform_4, window_bounds = array<i64: 2, 8>}, {pipeline_mode = #tpu.pipeline_mode<synchronous>, transform_indices = @transform_5, window_bounds = array<i64: 26, 26>}, {pipeline_mode = #tpu.pipeline_mode<synchronous>, transform_indices = @transform_6, window_bounds = array<i64: 1, 26>}, {pipeline_mode = #tpu.pipeline_mode<synchronous>, transform_indices = @transform_7, window_bounds = array<i64: 26, 10>}, {pipeline_mode = #tpu.pipeline_mode<synchronous>, transform_indices = @transform_8, window_bounds = array<i64: 8, 10>}, {pipeline_mode = #tpu.pipeline_mode<synchronous>, transform_indices = @transform_9, window_bounds = array<i64: 12, 10>}, {pipeline_mode = #tpu.pipeline_mode<synchronous>, transform_indices = @transform_10, window_bounds = array<i64: 1, 10>}, {pipeline_mode = #tpu.pipeline_mode<synchronous>, transform_indices = @transform_11, window_bounds = array<i64: 10, 4>}, {pipeline_mode = #tpu.pipeline_mode<synchronous>, transform_indices = @transform_12, window_bounds = array<i64: 1, 4>}, {transform_indices = @transform_13, window_bounds = array<i64: 2, 4>}]} {
    %c0 = arith.constant 0 : index
    %c0_0 = arith.constant 0 : index
    %c0_1 = arith.constant 0 : index
    %0 = vector.load %arg1[%c0, %c0_0, %c0_1] : memref<2x8x26xbf16, #tpu.memory_space<vmem>>, vector<2x8x26xbf16>
    %1 = vector.shape_cast %0 : vector<2x8x26xbf16> to vector<16x26xbf16>
    %c0_2 = arith.constant 0 : index
    %c0_3 = arith.constant 0 : index
    %2 = vector.load %arg6[%c0_2, %c0_3] : memref<26x26xbf16, #tpu.memory_space<vmem>>, vector<26x26xbf16>
    %cst = arith.constant dense<0.000000e+00> : vector<16x26xf32>
    %3 = tpu.matmul %1, %2, %cst {dimension_numbers = #tpu.dot_dimension_numbers<[1], [0], [0], [1], [0, 0, 1, 1], [], []>} : vector<16x26xbf16>, vector<26x26xbf16>, vector<16x26xf32> -> vector<16x26xf32>
    %4 = math.tanh %3 : vector<16x26xf32>
    %5 = vector.shape_cast %4 : vector<16x26xf32> to vector<2x8x26xf32>
    %c0_4 = arith.constant 0 : index
    %c0_5 = arith.constant 0 : index
    %6 = vector.load %arg7[%c0_4, %c0_5] : memref<1x26xf32, #tpu.memory_space<vmem>>, vector<1x26xf32>
    %7 = vector.shape_cast %6 : vector<1x26xf32> to vector<1x1x26xf32>
    %8 = vector.broadcast %7 : vector<1x1x26xf32> to vector<2x8x26xf32>
    %9 = arith.mulf %5, %8 : vector<2x8x26xf32>
    %cst_6 = arith.constant dense<0.000000e+00> : vector<2x8xf32>
    %10 = vector.multi_reduction <add>, %9, %cst_6 [2] : vector<2x8x26xf32> to vector<2x8xf32>
    %c0_7 = arith.constant 0 : index
    %c0_8 = arith.constant 0 : index
    %11 = vector.load %arg2[%c0_7, %c0_8] : memref<2x8xbf16, #tpu.memory_space<vmem>>, vector<2x8xbf16>
    %12 = arith.extf %11 : vector<2x8xbf16> to vector<2x8xf32>
    %13 = arith.addf %10, %12 : vector<2x8xf32>
    %cst_9 = arith.constant dense<0xFF800000> : vector<2xf32>
    %14 = vector.multi_reduction <maximumf>, %13, %cst_9 [1] : vector<2x8xf32> to vector<2xf32>
    %15 = vector.shape_cast %14 : vector<2xf32> to vector<2x1xf32>
    %16 = vector.broadcast %15 : vector<2x1xf32> to vector<2x8xf32>
    %17 = arith.subf %13, %16 : vector<2x8xf32>
    %18 = math.exp %17 : vector<2x8xf32>
    %cst_10 = arith.constant dense<0.000000e+00> : vector<2xf32>
    %19 = vector.multi_reduction <add>, %18, %cst_10 [1] : vector<2x8xf32> to vector<2xf32>
    %20 = vector.shape_cast %19 : vector<2xf32> to vector<2x1xf32>
    %21 = tpu.reciprocal %20 {approx = true} : vector<2x1xf32> -> vector<2x1xf32>
    %22 = vector.broadcast %21 : vector<2x1xf32> to vector<2x8xf32>
    %23 = arith.mulf %18, %22 : vector<2x8xf32>
    %24 = vector.shape_cast %23 : vector<2x8xf32> to vector<2x8x1xf32>
    %25 = arith.extf %0 : vector<2x8x26xbf16> to vector<2x8x26xf32>
    %26 = vector.broadcast %24 : vector<2x8x1xf32> to vector<2x8x26xf32>
    %27 = arith.mulf %26, %25 : vector<2x8x26xf32>
    %cst_11 = arith.constant dense<0.000000e+00> : vector<2x26xf32>
    %28 = vector.multi_reduction <add>, %27, %cst_11 [1] : vector<2x8x26xf32> to vector<2x26xf32>
    %c0_12 = arith.constant 0 : index
    %c0_13 = arith.constant 0 : index
    %c0_14 = arith.constant 0 : index
    %29 = vector.load %arg3[%c0_12, %c0_13, %c0_14] : memref<2x4x12xbf16, #tpu.memory_space<vmem>>, vector<2x4x12xbf16>
    %30 = arith.extf %29 : vector<2x4x12xbf16> to vector<2x4x12xf32>
    %c0_15 = arith.constant 0 : index
    %c0_16 = arith.constant 0 : index
    %31 = vector.load %arg4[%c0_15, %c0_16] : memref<2x4xbf16, #tpu.memory_space<vmem>>, vector<2x4xbf16>
    %32 = arith.extf %31 : vector<2x4xbf16> to vector<2x4xf32>
    %33 = vector.shape_cast %32 : vector<2x4xf32> to vector<2x4x1xf32>
    %34 = vector.broadcast %33 : vector<2x4x1xf32> to vector<2x4x12xf32>
    %35 = arith.mulf %30, %34 : vector<2x4x12xf32>
    %cst_17 = arith.constant dense<0.000000e+00> : vector<2x12xf32>
    %36 = vector.multi_reduction <add>, %35, %cst_17 [1] : vector<2x4x12xf32> to vector<2x12xf32>
    %c0_18 = arith.constant 0 : index
    %c0_19 = arith.constant 0 : index
    %37 = vector.load %arg5[%c0_18, %c0_19] : memref<2x8xbf16, #tpu.memory_space<vmem>>, vector<2x8xbf16>
    %38 = arith.extf %37 : vector<2x8xbf16> to vector<2x8xf32>
    %c0_20 = arith.constant 0 : index
    %c0_21 = arith.constant 0 : index
    %39 = vector.load %arg8[%c0_20, %c0_21] : memref<26x10xf32, #tpu.memory_space<vmem>>, vector<26x10xf32>
    %cst_22 = arith.constant dense<0.000000e+00> : vector<2x10xf32>
    %40 = tpu.matmul %28, %39, %cst_22 {dimension_numbers = #tpu.dot_dimension_numbers<[1], [0], [0], [1], [0, 0, 1, 1], [], []>} : vector<2x26xf32>, vector<26x10xf32>, vector<2x10xf32> -> vector<2x10xf32>
    %c0_23 = arith.constant 0 : index
    %c0_24 = arith.constant 0 : index
    %41 = vector.load %arg9[%c0_23, %c0_24] : memref<8x10xf32, #tpu.memory_space<vmem>>, vector<8x10xf32>
    %cst_25 = arith.constant dense<0.000000e+00> : vector<2x10xf32>
    %42 = tpu.matmul %38, %41, %cst_25 {dimension_numbers = #tpu.dot_dimension_numbers<[1], [0], [0], [1], [0, 0, 1, 1], [], []>} : vector<2x8xf32>, vector<8x10xf32>, vector<2x10xf32> -> vector<2x10xf32>
    %43 = arith.addf %40, %42 : vector<2x10xf32>
    %c0_26 = arith.constant 0 : index
    %c0_27 = arith.constant 0 : index
    %44 = vector.load %arg10[%c0_26, %c0_27] : memref<12x10xf32, #tpu.memory_space<vmem>>, vector<12x10xf32>
    %cst_28 = arith.constant dense<0.000000e+00> : vector<2x10xf32>
    %45 = tpu.matmul %36, %44, %cst_28 {dimension_numbers = #tpu.dot_dimension_numbers<[1], [0], [0], [1], [0, 0, 1, 1], [], []>} : vector<2x12xf32>, vector<12x10xf32>, vector<2x10xf32> -> vector<2x10xf32>
    %46 = arith.addf %43, %45 : vector<2x10xf32>
    %c0_29 = arith.constant 0 : index
    %c0_30 = arith.constant 0 : index
    %47 = vector.load %arg11[%c0_29, %c0_30] : memref<1x10xf32, #tpu.memory_space<vmem>>, vector<1x10xf32>
    %48 = vector.broadcast %47 : vector<1x10xf32> to vector<2x10xf32>
    %49 = arith.addf %46, %48 : vector<2x10xf32>
    %cst_31 = arith.constant 0.000000e+00 : f32
    %50 = vector.broadcast %cst_31 : f32 to vector<2x10xf32>
    %51 = arith.maximumf %49, %50 : vector<2x10xf32>
    %c0_32 = arith.constant 0 : index
    %c0_33 = arith.constant 0 : index
    %52 = vector.load %arg12[%c0_32, %c0_33] : memref<10x4xf32, #tpu.memory_space<vmem>>, vector<10x4xf32>
    %cst_34 = arith.constant dense<0.000000e+00> : vector<2x4xf32>
    %53 = tpu.matmul %51, %52, %cst_34 {dimension_numbers = #tpu.dot_dimension_numbers<[1], [0], [0], [1], [0, 0, 1, 1], [], []>} : vector<2x10xf32>, vector<10x4xf32>, vector<2x4xf32> -> vector<2x4xf32>
    %c0_35 = arith.constant 0 : index
    %c0_36 = arith.constant 0 : index
    %54 = vector.load %arg13[%c0_35, %c0_36] : memref<1x4xf32, #tpu.memory_space<vmem>>, vector<1x4xf32>
    %55 = vector.broadcast %54 : vector<1x4xf32> to vector<2x4xf32>
    %56 = arith.addf %53, %55 : vector<2x4xf32>
    %c0_37 = arith.constant 0 : index
    %c0_38 = arith.constant 0 : index
    %57 = vector.load %arg14[%c0_37, %c0_38] : memref<2x4xf32, #tpu.memory_space<vmem>>, vector<2x4xf32>
    tpu.vector_store %arg14[%c0_37, %c0_38], %56 {strides = array<i32>} : memref<2x4xf32, #tpu.memory_space<vmem>>, vector<2x4xf32>,
    return
  }
  func.func @transform_0(%arg0: i32) -> (i32, i32, i32) {
    %c0_i32 = arith.constant 0 : i32
    %c0_i32_0 = arith.constant 0 : i32
    %c0_i32_1 = arith.constant 0 : i32
    return %arg0, %c0_i32, %c0_i32_0 : i32, i32, i32
  }
  func.func @transform_1(%arg0: i32) -> (i32, i32) {
    %c0_i32 = arith.constant 0 : i32
    %c0_i32_0 = arith.constant 0 : i32
    return %arg0, %c0_i32 : i32, i32
  }
  func.func @transform_2(%arg0: i32) -> (i32, i32, i32) {
    %c0_i32 = arith.constant 0 : i32
    %c0_i32_0 = arith.constant 0 : i32
    %c0_i32_1 = arith.constant 0 : i32
    return %arg0, %c0_i32, %c0_i32_0 : i32, i32, i32
  }
  func.func @transform_3(%arg0: i32) -> (i32, i32) {
    %c0_i32 = arith.constant 0 : i32
    %c0_i32_0 = arith.constant 0 : i32
    return %arg0, %c0_i32 : i32, i32
  }
  func.func @transform_4(%arg0: i32) -> (i32, i32) {
    %c0_i32 = arith.constant 0 : i32
    %c0_i32_0 = arith.constant 0 : i32
    return %arg0, %c0_i32 : i32, i32
  }
  func.func @transform_5(%arg0: i32) -> (i32, i32) {
    %c0_i32 = arith.constant 0 : i32
    %c0_i32_0 = arith.constant 0 : i32
    %c0_i32_1 = arith.constant 0 : i32
    return %c0_i32, %c0_i32_0 : i32, i32
  }
  func.func @transform_6(%arg0: i32) -> (i32, i32) {
    %c0_i32 = arith.constant 0 : i32
    %c0_i32_0 = arith.constant 0 : i32
    %c0_i32_1 = arith.constant 0 : i32
    return %c0_i32, %c0_i32_0 : i32, i32
  }
  func.func @transform_7(%arg0: i32) -> (i32, i32) {
    %c0_i32 = arith.constant 0 : i32
    %c0_i32_0 = arith.constant 0 : i32
    %c0_i32_1 = arith.constant 0 : i32
    return %c0_i32, %c0_i32_0 : i32, i32
  }
  func.func @transform_8(%arg0: i32) -> (i32, i32) {
    %c0_i32 = arith.constant 0 : i32
    %c0_i32_0 = arith.constant 0 : i32
    %c0_i32_1 = arith.constant 0 : i32
    return %c0_i32, %c0_i32_0 : i32, i32
  }
  func.func @transform_9(%arg0: i32) -> (i32, i32) {
    %c0_i32 = arith.constant 0 : i32
    %c0_i32_0 = arith.constant 0 : i32
    %c0_i32_1 = arith.constant 0 : i32
    return %c0_i32, %c0_i32_0 : i32, i32
  }
  func.func @transform_10(%arg0: i32) -> (i32, i32) {
    %c0_i32 = arith.constant 0 : i32
    %c0_i32_0 = arith.constant 0 : i32
    %c0_i32_1 = arith.constant 0 : i32
    return %c0_i32, %c0_i32_0 : i32, i32
  }
  func.func @transform_11(%arg0: i32) -> (i32, i32) {
    %c0_i32 = arith.constant 0 : i32
    %c0_i32_0 = arith.constant 0 : i32
    %c0_i32_1 = arith.constant 0 : i32
    return %c0_i32, %c0_i32_0 : i32, i32
  }
  func.func @transform_12(%arg0: i32) -> (i32, i32) {
    %c0_i32 = arith.constant 0 : i32
    %c0_i32_0 = arith.constant 0 : i32
    %c0_i32_1 = arith.constant 0 : i32
    return %c0_i32, %c0_i32_0 : i32, i32
  }
  func.func @transform_13(%arg0: i32) -> (i32, i32) {
    %c0_i32 = arith.constant 0 : i32
    %c0_i32_0 = arith.constant 0 : i32
    return %arg0, %c0_i32 : i32, i32
  }
}

</mosaic_0001>

<llo_original>
// kernel: tpu_custom_call.1
$region0: #{tpu_custom_call.1}
  #allocation0 [shape = 'u32[]', space=smem, size = 0x4, offset = 0x4, fixed_abs, tag = 'smem constant byte address 0x4 - core index']
  #allocation1 [shape = 'u32[144,128]{1,0:T(1,128)}', space=vmem, size = 0x12000, scoped, tag = 'internal scratch']
  %s0 = inlined_call_operand.vmem [shape: bf16[2,8,26], index: 0, kind: input, shape index: {}]
  %s1 = inlined_call_operand.vmem [shape: bf16[2,8], index: 1, kind: input, shape index: {}]
  %s2 = inlined_call_operand.vmem [shape: bf16[2,4,12], index: 2, kind: input, shape index: {}]
  %s3 = inlined_call_operand.vmem [shape: bf16[2,4], index: 3, kind: input, shape index: {}]
  %s4 = inlined_call_operand.vmem [shape: bf16[2,8], index: 4, kind: input, shape index: {}]
  %s5 = inlined_call_operand.vmem [shape: bf16[26,26], index: 5, kind: input, shape index: {}]
  %s6 = inlined_call_operand.vmem [shape: f32[1,26], index: 6, kind: input, shape index: {}]
  %s7 = inlined_call_operand.vmem [shape: f32[26,10], index: 7, kind: input, shape index: {}]
  %s8 = inlined_call_operand.vmem [shape: f32[8,10], index: 8, kind: input, shape index: {}]
  %s9 = inlined_call_operand.vmem [shape: f32[12,10], index: 9, kind: input, shape index: {}]
  %s10 = inlined_call_operand.vmem [shape: f32[1,10], index: 10, kind: input, shape index: {}]
  %s11 = inlined_call_operand.vmem [shape: f32[10,4], index: 11, kind: input, shape index: {}]
  %s12 = inlined_call_operand.vmem [shape: f32[1,4], index: 12, kind: input, shape index: {}]
  %s13 = inlined_call_operand.hbm [shape: f32[2,4], index: 13, kind: output, shape index: {}]
  %s14 = sld [smem:[#allocation0]]
  $region62: #{tpu_custom_call.1} parent=0
    _
  %s16 = ssub.s32 1, %s14
  %s17 = scalar_select 0, %s16, %s14
  $region1: #{tpu_custom_call.1} parent=0
    #allocation2 [shape = 'u8[1024]{0}', space=vmem, size = 0x400, scoped, tag = 'output window, operand 0, single buffered']
    #allocation3 [shape = 's32[1]{0}', space=sflag, size = 0x4, scoped, tag = 'scoped memory for tpu_custom_call.1']
    %18 = vsyncpa [#allocation3], 0
    // Predicated region
    $region2: #{tpu_custom_call.1} parent=1 // pred_check
      _
    $region3: #{tpu_custom_call.1} parent=1 // pred_check_branch
      %20 = sbr.rel (0) target = $region5
    $region4: #{tpu_custom_call.1} parent=1 // pred_region
      _
    $region5: #{tpu_custom_call.1} parent=1 // pred_fallthru
      _
    // Predicated region
    $region6: #{tpu_custom_call.1} parent=1 // pred_check
      _
    $region7: #{tpu_custom_call.1} parent=1 // pred_check_branch
      %22 = sbr.rel (0) target = $region9
    $region8: #{tpu_custom_call.1} parent=1 // pred_region
      _
    $region9: #{tpu_custom_call.1} parent=1 // pred_fallthru
      _
    // Predicated region
    $region10: #{tpu_custom_call.1} parent=1 // pred_check
      _
    $region11: #{tpu_custom_call.1} parent=1 // pred_check_branch
      %24 = sbr.rel (0) target = $region13
    $region12: #{tpu_custom_call.1} parent=1 // pred_region
      _
    $region13: #{tpu_custom_call.1} parent=1 // pred_fallthru
      _
    // Predicated region
    $region14: #{tpu_custom_call.1} parent=1 // pred_check
      _
    $region15: #{tpu_custom_call.1} parent=1 // pred_check_branch
      %26 = sbr.rel (0) target = $region17
    $region16: #{tpu_custom_call.1} parent=1 // pred_region
      _
    $region17: #{tpu_custom_call.1} parent=1 // pred_fallthru
      _
    // Predicated region
    $region18: #{tpu_custom_call.1} parent=1 // pred_check
      _
    $region19: #{tpu_custom_call.1} parent=1 // pred_check_branch
      %28 = sbr.rel (0) target = $region21
    $region20: #{tpu_custom_call.1} parent=1 // pred_region
      _
    $region21: #{tpu_custom_call.1} parent=1 // pred_fallthru
      _
    // Predicated region
    $region22: #{tpu_custom_call.1} parent=1 // pred_check
      _
    $region23: #{tpu_custom_call.1} parent=1 // pred_check_branch
      %30 = sbr.rel (0) target = $region25
    $region24: #{tpu_custom_call.1} parent=1 // pred_region
      _
    $region25: #{tpu_custom_call.1} parent=1 // pred_fallthru
      _
    // Predicated region
    $region26: #{tpu_custom_call.1} parent=1 // pred_check
      _
    $region27: #{tpu_custom_call.1} parent=1 // pred_check_branch
      %32 = sbr.rel (0) target = $region29
    $region28: #{tpu_custom_call.1} parent=1 // pred_region
      _
    $region29: #{tpu_custom_call.1} parent=1 // pred_fallthru
      _
    // Predicated region
    $region30: #{tpu_custom_call.1} parent=1 // pred_check
      _
    $region31: #{tpu_custom_call.1} parent=1 // pred_check_branch
      %34 = sbr.rel (0) target = $region33
    $region32: #{tpu_custom_call.1} parent=1 // pred_region
      _
    $region33: #{tpu_custom_call.1} parent=1 // pred_fallthru
      _
    // Predicated region
    $region34: #{tpu_custom_call.1} parent=1 // pred_check
      _
    $region35: #{tpu_custom_call.1} parent=1 // pred_check_branch
      %36 = sbr.rel (0) target = $region37
    $region36: #{tpu_custom_call.1} parent=1 // pred_region
      _
    $region37: #{tpu_custom_call.1} parent=1 // pred_fallthru
      _
    // Predicated region
    $region38: #{tpu_custom_call.1} parent=1 // pred_check
      _
    $region39: #{tpu_custom_call.1} parent=1 // pred_check_branch
      %38 = sbr.rel (0) target = $region41
    $region40: #{tpu_custom_call.1} parent=1 // pred_region
      _
    $region41: #{tpu_custom_call.1} parent=1 // pred_fallthru
      _
    // Predicated region
    $region42: #{tpu_custom_call.1} parent=1 // pred_check
      _
    $region43: #{tpu_custom_call.1} parent=1 // pred_check_branch
      %40 = sbr.rel (0) target = $region45
    $region44: #{tpu_custom_call.1} parent=1 // pred_region
      _
    $region45: #{tpu_custom_call.1} parent=1 // pred_fallthru
      _
    // Predicated region
    $region46: #{tpu_custom_call.1} parent=1 // pred_check
      _
    $region47: #{tpu_custom_call.1} parent=1 // pred_check_branch
      %42 = sbr.rel (0) target = $region49
    $region48: #{tpu_custom_call.1} parent=1 // pred_region
      _
    $region49: #{tpu_custom_call.1} parent=1 // pred_fallthru
      _
    // Predicated region
    $region50: #{tpu_custom_call.1} parent=1 // pred_check
      _
    $region51: #{tpu_custom_call.1} parent=1 // pred_check_branch
      %44 = sbr.rel (0) target = $region53
    $region52: #{tpu_custom_call.1} parent=1 // pred_region
      _
    $region53: #{tpu_custom_call.1} parent=1 // pred_fallthru
      _
    %v46 = vld [vmem:[%s0] sm:$0xf]
    %v47 = vld [vmem:[%s0 + $0x4] sm:$0xf]
    %v48 = vld [vmem:[%s5] sm:$0xf]
    %v49 = vld [vmem:[%s5 + $0x4] sm:$0xf]
    %v50 = vld [vmem:[%s5 + $0x8] sm:$0xf]
    %v51 = vld [vmem:[%s5 + $0xc] sm:$0x1]
    %v54 = vunpack.c.l.b16 %v46
    %v55 = vunpack.c.l.b16 %v47
    %v56 = vpack.c.b16 %v55, %v54
    %v61 = vunpack.c.l.b16 %v48
    %v62 = vunpack.c.l.b16 %v49
    %v63 = vunpack.c.l.b16 %v50
    %v64 = vunpack.c.l.b16 %v51
    %v65 = vpack.c.b16 %v62, %v61
    %v66 = vpack.c.b16 %v64, %v63
    %vm68 = vcmask 211968
    %v70 = vsel %vm68, %v56, 0
    %vm72 = vcmask 1044480
    %v74 = vsel %vm72, %v66, 0
    %76 = vmatprep.subr.bf16.mxu0 0
    %77 = vmatpush1.bf16.msra.mxu0 %v65
    %78 = vmatprep.subr.bf16.mxu0 0
    %79 = vmatpush1.bf16.msra.mxu0 %v74
    %80 = vmatprep.subr.bf16.mxu0 0
    %81 = vmatpush1.bf16.msra.mxu0 0
    %82 = vmatprep.subr.bf16.mxu0 0
    %83 = vmatpush1.bf16.msra.mxu0 0
    %84 = vmatprep.subr.bf16.mxu0 0
    %85 = vmatpush1.bf16.msra.mxu0 0
    %86 = vmatprep.subr.bf16.mxu0 0
    %87 = vmatpush1.bf16.msra.mxu0 0
    %88 = vmatprep.subr.bf16.mxu0 0
    %89 = vmatpush1.bf16.msra.mxu0 0
    %90 = vmatprep.subr.bf16.mxu0 0
    %91 = vmatpush1.bf16.msra.mxu0 0
    %92 = vmatprep.subr.bf16.mxu0 0
    %93 = vmatpush1.bf16.msra.mxu0 0
    %94 = vmatprep.subr.bf16.mxu0 0
    %95 = vmatpush1.bf16.msra.mxu0 0
    %96 = vmatprep.subr.bf16.mxu0 0
    %97 = vmatpush1.bf16.msra.mxu0 0
    %98 = vmatprep.subr.bf16.mxu0 0
    %99 = vmatpush1.bf16.msra.mxu0 0
    %100 = vmatprep.subr.bf16.mxu0 0
    %101 = vmatpush1.bf16.msra.mxu0 0
    %102 = vmatprep.subr.bf16.mxu0 0
    %103 = vmatpush1.bf16.msra.mxu0 0
    %104 = vmatprep.subr.bf16.mxu0 0
    %105 = vmatpush1.bf16.msra.mxu0 0
    %106 = vmatprep.subr.bf16.mxu0 0
    %107 = vmatpush1.bf16.msra.mxu0 0
    %108 = vmatprep.mubr.bf16.mxu0 0
    %109 = vmatmul.mubr.bf16.gmra.mrb[0].mxu0 %v70
    %v110 = vpop.f32.mrb[0].mxu0
    %v111 = vadd.f32 0.0, %v110
    %v112 = vpop.f32.mrb[0].mxu0
    %v113 = vpop.f32.mrb[0].mxu0
    %v114 = vadd.f32 0.0, %v113
    %v115 = vpop.f32.mrb[0].mxu0
    %116 = vdwg.mxu0
    %v117 = vtanh.pop %v111
    %v118 = vtanh.pop %v114
    %v119 = vld [vmem:[%s6] sm:$0x1]
    %v121 = vlaneseq
    %v122 = vshrl.u32 %v121, 7
    %v123 = vsub.s32 0, %v122
    %v124 = vrot.slane %v119, %v123
    %v126 = vmul.f32 %v117, %v124
    %v127 = vmul.f32 %v118, %v124
    %v128 = vsel %vm68, %v126, 0.0
    %129 = vadd.xlane.f32.xlu0 %v128
    %v130 = vpop.xlane.xlu0 %129
    %v131 = vsel %vm68, %v127, 0.0
    %132 = vadd.xlane.f32.xlu0 %v131
    %v133 = vpop.xlane.xlu0 %132
    %v134 = vld [vmem:[%s1] sm:$0x1]
    %v135 = vunpack.c.l.bf16 %v134
    %v138 = vunpack.c.l.s4 1983009808
    %v139 = vunpack.c.0.s8 %v138
    %v140 = vlaneseq
    %v141 = vshrl.u32 %v140, 7
    %v142 = vsub.s32 %v139, %v141
    %v143 = vrot.slane %v135, %v142
    %v144 = vlaneseq
    %v145 = vshrl.u32 %v144, 7
    %v146 = vsub.s32 0, %v145
    %v147 = vrot.slane %v143, %v146
    %149 = vbcast.lane.b32.xlu0 %v147, 256
    %v150 = vpop.permute.xlu0 %149
    %v151 = vlaneseq
    %v152 = vshrl.u32 %v151, 7
    %v153 = vsub.s32 1, %v152
    %v154 = vrot.slane %v143, %v153
    %156 = vbcast.lane.b32.xlu0 %v154, 256
    %v157 = vpop.permute.xlu0 %156
    %v160 = vadd.f32 %v130, %v150
    %v161 = vadd.f32 %v133, %v157
    %164 = vset.pattern.permute.xlu0 0
    %165 = vperm.xlu0 %164, %v160
    %v166 = vpop.permute.xlu0 %165
    %167 = vset.pattern.permute.xlu0 0
    %168 = vperm.xlu0 %167, %v161
    %v169 = vpop.permute.xlu0 %168
    %v170 = vlaneseq
    %v171 = vand.u32 %v170, 127
    %v172 = vlaneseq
    %v173 = vshrl.u32 %v172, 7
    %v174 = vsub.s32 %v171, %v173
    %v175 = vrot.slane %v166, %v174
    %v176 = vlaneseq
    %v177 = vshrl.u32 %v176, 7
    %v178 = vsub.s32 %v171, %v177
    %v179 = vrot.slane %v169, %v178
    %vm180 = vcmask 1041409
    %v181 = vsel %vm180, %v179, %v175
    %vm183 = vcmask 58368
    %v184 = vsel %vm183, %v181, -inf
    %185 = vmax.xlane.f32.xlu0 %v184
    %v186 = vpop.xlane.xlu0 %185
    %v188 = vlaneseq
    %v189 = vshrl.u32 %v188, 7
    %v190 = vsub.s32 0, %v189
    %v191 = vrot.slane %v186, %v190
    %v192 = vlaneseq
    %v193 = vshrl.u32 %v192, 7
    %v194 = vsub.s32 1, %v193
    %v195 = vrot.slane %v186, %v194
    %v198 = vsub.f32 %v160, %v191
    %v199 = vsub.f32 %v161, %v195
    %v200 = vmul.f32 %v198, 1.442695
    %v201 = vpow.pop %v200
    %v202 = vmul.f32 %v199, 1.442695
    %v203 = vpow.pop %v202
    %206 = vset.pattern.permute.xlu0 0
    %207 = vperm.xlu0 %206, %v201
    %v208 = vpop.permute.xlu0 %207
    %209 = vset.pattern.permute.xlu0 0
    %210 = vperm.xlu0 %209, %v203
    %v211 = vpop.permute.xlu0 %210
    %v212 = vlaneseq
    %v213 = vshrl.u32 %v212, 7
    %v214 = vsub.s32 %v171, %v213
    %v215 = vrot.slane %v208, %v214
    %v216 = vlaneseq
    %v217 = vshrl.u32 %v216, 7
    %v218 = vsub.s32 %v171, %v217
    %v219 = vrot.slane %v211, %v218
    %v220 = vsel %vm180, %v219, %v215
    %v222 = vsel %vm183, %v220, 0.0
    %223 = vadd.xlane.f32.xlu0 %v222
    %v224 = vpop.xlane.xlu0 %223
    %v225 = vrcp.pop %v224
    %v227 = vlaneseq
    %v228 = vshrl.u32 %v227, 7
    %v229 = vsub.s32 0, %v228
    %v230 = vrot.slane %v225, %v229
    %v231 = vlaneseq
    %v232 = vshrl.u32 %v231, 7
    %v233 = vsub.s32 1, %v232
    %v234 = vrot.slane %v225, %v233
    %v237 = vmul.f32 %v201, %v230
    %v238 = vmul.f32 %v203, %v234
    %v239 = vunpack.c.l.bf16 %v46
    %v240 = vunpack.c.l.bf16 %v47
    %242 = vset.pattern.permute.xlu0 0
    %243 = vperm.xlu0 %242, %v237
    %v244 = vpop.permute.xlu0 %243
    %247 = vset.pattern.permute.xlu0 0
    %248 = vperm.xlu0 %247, %v238
    %v249 = vpop.permute.xlu0 %248
    %v251 = vmul.f32 %v244, %v239
    %v252 = vmul.f32 %v249, %v240
    %v253 = vsel %vm68, %v251, 0.0
    %v254 = vrot.slane %v253, 4
    %v255 = vadd.f32 %v253, %v254
    %v256 = vrot.slane %v255, 2
    %v257 = vadd.f32 %v255, %v256
    %v258 = vrot.slane %v257, 1
    %v259 = vadd.f32 %v257, %v258
    %v260 = vsel %vm68, %v252, 0.0
    %v261 = vrot.slane %v260, 4
    %v262 = vadd.f32 %v260, %v261
    %v263 = vrot.slane %v262, 2
    %v264 = vadd.f32 %v262, %v263
    %v265 = vrot.slane %v264, 1
    %v266 = vadd.f32 %v264, %v265
    %v267 = vld [vmem:[%s2] sm:$0x3]
    %v268 = vld [vmem:[%s2 + $0x2] sm:$0x3]
    %v269 = vunpack.c.l.bf16 %v267
    %v270 = vunpack.c.l.bf16 %v268
    %v271 = vld [vmem:[%s3] sm:$0x1]
    %v272 = vunpack.c.l.bf16 %v271
    %v273 = vlaneseq
    %v274 = vshrl.u32 %v273, 7
    %v275 = vsub.s32 0, %v274
    %v276 = vrot.slane %v272, %v275
    %278 = vbcast.lane.b32.xlu0 %v276, 256
    %v279 = vpop.permute.xlu0 %278
    %v280 = vlaneseq
    %v281 = vshrl.u32 %v280, 7
    %v282 = vsub.s32 1, %v281
    %v283 = vrot.slane %v272, %v282
    %285 = vbcast.lane.b32.xlu0 %v283, 256
    %v286 = vpop.permute.xlu0 %285
    %v287 = vmul.f32 %v269, %v279
    %v288 = vmul.f32 %v270, %v286
    %vm289 = vcmask 93184
    %v290 = vsel %vm289, %v287, 0.0
    %v291 = vrot.slane %v290, 4
    %v292 = vadd.f32 %v290, %v291
    %v293 = vrot.slane %v292, 2
    %v294 = vadd.f32 %v292, %v293
    %v295 = vrot.slane %v294, 1
    %v296 = vadd.f32 %v294, %v295
    %v297 = vsel %vm289, %v288, 0.0
    %v298 = vrot.slane %v297, 4
    %v299 = vadd.f32 %v297, %v298
    %v300 = vrot.slane %v299, 2
    %v301 = vadd.f32 %v299, %v300
    %v302 = vrot.slane %v301, 1
    %v303 = vadd.f32 %v301, %v302
    %v304 = vld [vmem:[%s4] sm:$0x1]
    %v305 = vunpack.c.l.bf16 %v304
    %v306 = vld [vmem:[%s7] sm:$0xff]
    %v307 = vld [vmem:[%s7 + $0x8] sm:$0xff]
    %v308 = vld [vmem:[%s7 + $0x10] sm:$0xff]
    %v309 = vld [vmem:[%s7 + $0x18] sm:$0x3]
    %v310 = vld [vmem:[%s8] sm:$0xff]
    %vm311 = vcmask 64512
    %v313 = vsel %vm311, %v305, 0
    %315 = vmatprep.subr.mxu0 0.0
    %316 = vmatpush1.msra.mxu0 %v310
    %317 = vmatprep.subr.mxu0 0.0
    %318 = vmatpush1.msra.mxu0 0.0
    %319 = vmatprep.subr.mxu0 0.0
    %320 = vmatpush1.msra.mxu0 0.0
    %321 = vmatprep.subr.mxu0 0.0
    %322 = vmatpush1.msra.mxu0 0.0
    %323 = vmatprep.subr.mxu0 0.0
    %324 = vmatpush1.msra.mxu0 0.0
    %325 = vmatprep.subr.mxu0 0.0
    %326 = vmatpush1.msra.mxu0 0.0
    %327 = vmatprep.subr.mxu0 0.0
    %328 = vmatpush1.msra.mxu0 0.0
    %329 = vmatprep.subr.mxu0 0.0
    %330 = vmatpush1.msra.mxu0 0.0
    %331 = vmatprep.subr.mxu0 0.0
    %332 = vmatpush1.msra.mxu0 0.0
    %333 = vmatprep.subr.mxu0 0.0
    %334 = vmatpush1.msra.mxu0 0.0
    %335 = vmatprep.subr.mxu0 0.0
    %336 = vmatpush1.msra.mxu0 0.0
    %337 = vmatprep.subr.mxu0 0.0
    %338 = vmatpush1.msra.mxu0 0.0
    %339 = vmatprep.subr.mxu0 0.0
    %340 = vmatpush1.msra.mxu0 0.0
    %341 = vmatprep.subr.mxu0 0.0
    %342 = vmatpush1.msra.mxu0 0.0
    %343 = vmatprep.subr.mxu0 0.0
    %344 = vmatpush1.msra.mxu0 0.0
    %345 = vmatprep.subr.mxu0 0.0
    %346 = vmatpush1.msra.mxu0 0.0
    %347 = vmatprep.subr.mxu0 0.0
    %348 = vmatpush1.msra.mxu0 0.0
    %349 = vmatprep.subr.mxu0 0.0
    %350 = vmatpush1.msra.mxu0 0.0
    %351 = vmatprep.subr.mxu0 0.0
    %352 = vmatpush1.msra.mxu0 0.0
    %353 = vmatprep.subr.mxu0 0.0
    %354 = vmatpush1.msra.mxu0 0.0
    %355 = vmatprep.subr.mxu0 0.0
    %356 = vmatpush1.msra.mxu0 0.0
    %357 = vmatprep.subr.mxu0 0.0
    %358 = vmatpush1.msra.mxu0 0.0
    %359 = vmatprep.subr.mxu0 0.0
    %360 = vmatpush1.msra.mxu0 0.0
    %361 = vmatprep.subr.mxu0 0.0
    %362 = vmatpush1.msra.mxu0 0.0
    %363 = vmatprep.subr.mxu0 0.0
    %364 = vmatpush1.msra.mxu0 0.0
    %365 = vmatprep.subr.mxu0 0.0
    %366 = vmatpush1.msra.mxu0 0.0
    %367 = vmatprep.subr.mxu0 0.0
    %368 = vmatpush1.msra.mxu0 0.0
    %369 = vmatprep.subr.mxu0 0.0
    %370 = vmatpush1.msra.mxu0 0.0
    %371 = vmatprep.subr.mxu0 0.0
    %372 = vmatpush1.msra.mxu0 0.0
    %373 = vmatprep.subr.mxu0 0.0
    %374 = vmatpush1.msra.mxu0 0.0
    %375 = vmatprep.subr.mxu0 0.0
    %376 = vmatpush1.msra.mxu0 0.0
    %377 = vmatprep.subr.mxu0 0.0
    %378 = vmatpush1.msra.mxu0 0.0
    %379 = vmatprep.mubr.f32.mxu0 0.0
    %380 = vmatmul.mubr.f32.gmra.mrb[0].mxu0 %v313
    %v381 = vpop.f32.mrb[0].mxu0
    %v382 = vadd.f32 0.0, %v381
    %v383 = vpop.f32.mrb[0].mxu0
    %384 = vdwg.mxu0
    %v387 = vsel %vm180, %v266, %v259
    %v388 = vsel %vm68, %v387, 0
    %vm390 = vcmask 1041408
    %v392 = vsel %vm390, %v309, 0
    %394 = vmatprep.subr.mxu0 0.0
    %395 = vmatpush1.msra.mxu0 %v306
    %396 = vmatprep.subr.mxu0 0.0
    %397 = vmatpush1.msra.mxu0 %v307
    %398 = vmatprep.subr.mxu0 0.0
    %399 = vmatpush1.msra.mxu0 %v308
    %400 = vmatprep.subr.mxu0 0.0
    %401 = vmatpush1.msra.mxu0 %v392
    %402 = vmatprep.subr.mxu0 0.0
    %403 = vmatpush1.msra.mxu0 0.0
    %404 = vmatprep.subr.mxu0 0.0
    %405 = vmatpush1.msra.mxu0 0.0
    %406 = vmatprep.subr.mxu0 0.0
    %407 = vmatpush1.msra.mxu0 0.0
    %408 = vmatprep.subr.mxu0 0.0
    %409 = vmatpush1.msra.mxu0 0.0
    %410 = vmatprep.subr.mxu0 0.0
    %411 = vmatpush1.msra.mxu0 0.0
    %412 = vmatprep.subr.mxu0 0.0
    %413 = vmatpush1.msra.mxu0 0.0
    %414 = vmatprep.subr.mxu0 0.0
    %415 = vmatpush1.msra.mxu0 0.0
    %416 = vmatprep.subr.mxu0 0.0
    %417 = vmatpush1.msra.mxu0 0.0
    %418 = vmatprep.subr.mxu0 0.0
    %419 = vmatpush1.msra.mxu0 0.0
    %420 = vmatprep.subr.mxu0 0.0
    %421 = vmatpush1.msra.mxu0 0.0
    %422 = vmatprep.subr.mxu0 0.0
    %423 = vmatpush1.msra.mxu0 0.0
    %424 = vmatprep.subr.mxu0 0.0
    %425 = vmatpush1.msra.mxu0 0.0
    %426 = vmatprep.subr.mxu0 0.0
    %427 = vmatpush1.msra.mxu0 0.0
    %428 = vmatprep.subr.mxu0 0.0
    %429 = vmatpush1.msra.mxu0 0.0
    %430 = vmatprep.subr.mxu0 0.0
    %431 = vmatpush1.msra.mxu0 0.0
    %432 = vmatprep.subr.mxu0 0.0
    %433 = vmatpush1.msra.mxu0 0.0
    %434 = vmatprep.subr.mxu0 0.0
    %435 = vmatpush1.msra.mxu0 0.0
    %436 = vmatprep.subr.mxu0 0.0
    %437 = vmatpush1.msra.mxu0 0.0
    %438 = vmatprep.subr.mxu0 0.0
    %439 = vmatpush1.msra.mxu0 0.0
    %440 = vmatprep.subr.mxu0 0.0
    %441 = vmatpush1.msra.mxu0 0.0
    %442 = vmatprep.subr.mxu0 0.0
    %443 = vmatpush1.msra.mxu0 0.0
    %444 = vmatprep.subr.mxu0 0.0
    %445 = vmatpush1.msra.mxu0 0.0
    %446 = vmatprep.subr.mxu0 0.0
    %447 = vmatpush1.msra.mxu0 0.0
    %448 = vmatprep.subr.mxu0 0.0
    %449 = vmatpush1.msra.mxu0 0.0
    %450 = vmatprep.subr.mxu0 0.0
    %451 = vmatpush1.msra.mxu0 0.0
    %452 = vmatprep.subr.mxu0 0.0
    %453 = vmatpush1.msra.mxu0 0.0
    %454 = vmatprep.subr.mxu0 0.0
    %455 = vmatpush1.msra.mxu0 0.0
    %456 = vmatprep.subr.mxu0 0.0
    %457 = vmatpush1.msra.mxu0 0.0
    %458 = vmatprep.mubr.f32.mxu0 0.0
    %459 = vmatmul.mubr.f32.gmra.mrb[0].mxu0 %v388
    %v460 = vpop.f32.mrb[0].mxu0
    %v461 = vadd.f32 %v382, %v460
    %v462 = vpop.f32.mrb[0].mxu0
    %463 = vdwg.mxu0
    %v464 = vld [vmem:[%s9] sm:$0xff]
    %v465 = vld [vmem:[%s9 + $0x8] sm:$0xf]
    %v468 = vsel %vm180, %v303, %v296
    %vm469 = vcmask 97280
    %v470 = vsel %vm469, %v468, 0
    %vm472 = vcmask 1043456
    %v474 = vsel %vm472, %v465, 0
    %476 = vmatprep.subr.mxu0 0.0
    %477 = vmatpush1.msra.mxu0 %v464
    %478 = vmatprep.subr.mxu0 0.0
    %479 = vmatpush1.msra.mxu0 %v474
    %480 = vmatprep.subr.mxu0 0.0
    %481 = vmatpush1.msra.mxu0 0.0
    %482 = vmatprep.subr.mxu0 0.0
    %483 = vmatpush1.msra.mxu0 0.0
    %484 = vmatprep.subr.mxu0 0.0
    %485 = vmatpush1.msra.mxu0 0.0
    %486 = vmatprep.subr.mxu0 0.0
    %487 = vmatpush1.msra.mxu0 0.0
    %488 = vmatprep.subr.mxu0 0.0
    %489 = vmatpush1.msra.mxu0 0.0
    %490 = vmatprep.subr.mxu0 0.0
    %491 = vmatpush1.msra.mxu0 0.0
    %492 = vmatprep.subr.mxu0 0.0
    %493 = vmatpush1.msra.mxu0 0.0
    %494 = vmatprep.subr.mxu0 0.0
    %495 = vmatpush1.msra.mxu0 0.0
    %496 = vmatprep.subr.mxu0 0.0
    %497 = vmatpush1.msra.mxu0 0.0
    %498 = vmatprep.subr.mxu0 0.0
    %499 = vmatpush1.msra.mxu0 0.0
    %500 = vmatprep.subr.mxu0 0.0
    %501 = vmatpush1.msra.mxu0 0.0
    %502 = vmatprep.subr.mxu0 0.0
    %503 = vmatpush1.msra.mxu0 0.0
    %504 = vmatprep.subr.mxu0 0.0
    %505 = vmatpush1.msra.mxu0 0.0
    %506 = vmatprep.subr.mxu0 0.0
    %507 = vmatpush1.msra.mxu0 0.0
    %508 = vmatprep.subr.mxu0 0.0
    %509 = vmatpush1.msra.mxu0 0.0
    %510 = vmatprep.subr.mxu0 0.0
    %511 = vmatpush1.msra.mxu0 0.0
    %512 = vmatprep.subr.mxu0 0.0
    %513 = vmatpush1.msra.mxu0 0.0
    %514 = vmatprep.subr.mxu0 0.0
    %515 = vmatpush1.msra.mxu0 0.0
    %516 = vmatprep.subr.mxu0 0.0
    %517 = vmatpush1.msra.mxu0 0.0
    %518 = vmatprep.subr.mxu0 0.0
    %519 = vmatpush1.msra.mxu0 0.0
    %520 = vmatprep.subr.mxu0 0.0
    %521 = vmatpush1.msra.mxu0 0.0
    %522 = vmatprep.subr.mxu0 0.0
    %523 = vmatpush1.msra.mxu0 0.0
    %524 = vmatprep.subr.mxu0 0.0
    %525 = vmatpush1.msra.mxu0 0.0
    %526 = vmatprep.subr.mxu0 0.0
    %527 = vmatpush1.msra.mxu0 0.0
    %528 = vmatprep.subr.mxu0 0.0
    %529 = vmatpush1.msra.mxu0 0.0
    %530 = vmatprep.subr.mxu0 0.0
    %531 = vmatpush1.msra.mxu0 0.0
    %532 = vmatprep.subr.mxu0 0.0
    %533 = vmatpush1.msra.mxu0 0.0
    %534 = vmatprep.subr.mxu0 0.0
    %535 = vmatpush1.msra.mxu0 0.0
    %536 = vmatprep.subr.mxu0 0.0
    %537 = vmatpush1.msra.mxu0 0.0
    %538 = vmatprep.subr.mxu0 0.0
    %539 = vmatpush1.msra.mxu0 0.0
    %540 = vmatprep.mubr.f32.mxu0 0.0
    %541 = vmatmul.mubr.f32.gmra.mrb[0].mxu0 %v470
    %v542 = vpop.f32.mrb[0].mxu0
    %v543 = vadd.f32 0.0, %v542
    %v544 = vpop.f32.mrb[0].mxu0
    %545 = vdwg.mxu0
    %v546 = vadd.f32 %v461, %v543
    %v547 = vld [vmem:[%s10] sm:$0x1]
    %v549 = vlaneseq
    %v550 = vshrl.u32 %v549, 7
    %v551 = vsub.s32 0, %v550
    %v552 = vrot.slane %v547, %v551
    %v554 = vadd.f32 %v546, %v552
    %v555 = vmax.f32 %v554, 0.0
    %v556 = vld [vmem:[%s11] sm:$0xff]
    %v557 = vld [vmem:[%s11 + $0x8] sm:$0x3]
    %v558 = vld [vmem:[%s12] sm:$0x1]
    %v560 = vlaneseq
    %v561 = vshrl.u32 %v560, 7
    %v562 = vsub.s32 0, %v561
    %v563 = vrot.slane %v558, %v562
    %vm565 = vcmask 80896
    %v567 = vsel %vm565, %v555, 0
    %v570 = vsel %vm390, %v557, 0
    %572 = vmatprep.subr.mxu0 0.0
    %573 = vmatpush1.msra.mxu0 %v556
    %574 = vmatprep.subr.mxu0 0.0
    %575 = vmatpush1.msra.mxu0 %v570
    %576 = vmatprep.subr.mxu0 0.0
    %577 = vmatpush1.msra.mxu0 0.0
    %578 = vmatprep.subr.mxu0 0.0
    %579 = vmatpush1.msra.mxu0 0.0
    %580 = vmatprep.subr.mxu0 0.0
    %581 = vmatpush1.msra.mxu0 0.0
    %582 = vmatprep.subr.mxu0 0.0
    %583 = vmatpush1.msra.mxu0 0.0
    %584 = vmatprep.subr.mxu0 0.0
    %585 = vmatpush1.msra.mxu0 0.0
    %586 = vmatprep.subr.mxu0 0.0
    %587 = vmatpush1.msra.mxu0 0.0
    %588 = vmatprep.subr.mxu0 0.0
    %589 = vmatpush1.msra.mxu0 0.0
    %590 = vmatprep.subr.mxu0 0.0
    %591 = vmatpush1.msra.mxu0 0.0
    %592 = vmatprep.subr.mxu0 0.0
    %593 = vmatpush1.msra.mxu0 0.0
    %594 = vmatprep.subr.mxu0 0.0
    %595 = vmatpush1.msra.mxu0 0.0
    %596 = vmatprep.subr.mxu0 0.0
    %597 = vmatpush1.msra.mxu0 0.0
    %598 = vmatprep.subr.mxu0 0.0
    %599 = vmatpush1.msra.mxu0 0.0
    %600 = vmatprep.subr.mxu0 0.0
    %601 = vmatpush1.msra.mxu0 0.0
    %602 = vmatprep.subr.mxu0 0.0
    %603 = vmatpush1.msra.mxu0 0.0
    %604 = vmatprep.subr.mxu0 0.0
    %605 = vmatpush1.msra.mxu0 0.0
    %606 = vmatprep.subr.mxu0 0.0
    %607 = vmatpush1.msra.mxu0 0.0
    %608 = vmatprep.subr.mxu0 0.0
    %609 = vmatpush1.msra.mxu0 0.0
    %610 = vmatprep.subr.mxu0 0.0
    %611 = vmatpush1.msra.mxu0 0.0
    %612 = vmatprep.subr.mxu0 0.0
    %613 = vmatpush1.msra.mxu0 0.0
    %614 = vmatprep.subr.mxu0 0.0
    %615 = vmatpush1.msra.mxu0 0.0
    %616 = vmatprep.subr.mxu0 0.0
    %617 = vmatpush1.msra.mxu0 0.0
    %618 = vmatprep.subr.mxu0 0.0
    %619 = vmatpush1.msra.mxu0 0.0
    %620 = vmatprep.subr.mxu0 0.0
    %621 = vmatpush1.msra.mxu0 0.0
    %622 = vmatprep.subr.mxu0 0.0
    %623 = vmatpush1.msra.mxu0 0.0
    %624 = vmatprep.subr.mxu0 0.0
    %625 = vmatpush1.msra.mxu0 0.0
    %626 = vmatprep.subr.mxu0 0.0
    %627 = vmatpush1.msra.mxu0 0.0
    %628 = vmatprep.subr.mxu0 0.0
    %629 = vmatpush1.msra.mxu0 0.0
    %630 = vmatprep.subr.mxu0 0.0
    %631 = vmatpush1.msra.mxu0 0.0
    %632 = vmatprep.subr.mxu0 0.0
    %633 = vmatpush1.msra.mxu0 0.0
    %634 = vmatprep.subr.mxu0 0.0
    %635 = vmatpush1.msra.mxu0 0.0
    %636 = vmatprep.mubr.f32.mxu0 0.0
    %637 = vmatmul.mubr.f32.gmra.mrb[0].mxu0 %v567
    %v638 = vpop.f32.mrb[0].mxu0
    %v639 = vadd.f32 %v563, %v638
    %v640 = vpop.f32.mrb[0].mxu0
    %641 = vdwg.mxu0
    %vm642 = vcmask 25600
    %643 = vst.msk [vmem:[#allocation2] sm:$0x3] %vm642, %v639
    // Predicated region
    $region54: #{tpu_custom_call.1} parent=1 // pred_check
      _
    $region55: #{tpu_custom_call.1} parent=1 // pred_check_branch
      %645 = sbr.rel (0) target = $region57
    $region56: #{tpu_custom_call.1} parent=1 // pred_region
      %s647 = ssub.s32 32, 32
      %648 = vsyncadd [#allocation3], %s647
      %s650 = sshll.u32 [#allocation2], 4
      %s651 = int_to_ptr.vmem [resolvable:$true] %s650
      %653 = dma.vmem_to_hbm [thread:$0]  %s651, 32, %s13, [#allocation3]
    $region57: #{tpu_custom_call.1} parent=1 // pred_fallthru
      _
    // Predicated region
    $region58: #{tpu_custom_call.1} parent=1 // pred_check
      _
    $region59: #{tpu_custom_call.1} parent=1 // pred_check_branch
      %655 = sbr.rel (0) target = $region61
    $region60: #{tpu_custom_call.1} parent=1 // pred_region
      %656 = dma.done [#allocation3], 32
    $region61: #{tpu_custom_call.1} parent=1 // pred_fallthru
      _
    %657 = vsyncpa [#allocation3], 1

</llo_original>
